<compile_context>
chip_gen: v5e
topology: v5e:2x2
jax: 0.10.0
libtpu: 0.0.40
codegen_flags: <defaults>
</compile_context>

<pallas_src>
import functools

import jax
import jax.numpy as jnp
from jax import lax
from jax.experimental import pallas as pl
from jax.experimental.pallas import tpu as pltpu

LN_EPS = 1e-5  # nn.LayerNorm default


def _round_up(x, m):
    return ((x + m - 1) // m) * m


def _detect_chip():
    try:
        kind = jax.devices()[0].device_kind.lower()
    except Exception:
        return "unknown"
    if "v5 lite" in kind or "v5e" in kind or "v5litepod" in kind:
        return "v5e"
    if "v6" in kind:
        return "v6e"
    if "v7" in kind:
        return "v7x"
    return "unknown"


# (block_tokens, block_mlp) per generation:
#   v5e: ridge ~240 flop/B -> tm=256 already compute-bound; don't grow.
#   v6e: ridge ~680 flop/B -> tm=512 to get off the weight-streaming roofline.
#   v7x: 64 MiB VMEM -> shrink weight tile (tn=256) and spend it on tm.
_TILE_DEFAULTS = {
    "v5e": (256, 512),
    "v6e": (512, 512),
    "v7x": (384, 256),
    "unknown": (256, 512),
}


def prepack_ffn_weights(gamma, beta, w1_t, w3_t, w2_t, *, block_mlp=None, chip=None):
    """One-time host-side weight repack (call at parameter-load time, NOT per forward)."""
    chip = chip or _detect_chip()
    if block_mlp is None:
        block_mlp = _TILE_DEFAULTS[chip][1]

    dim, mlp_dim = w1_t.shape
    assert w3_t.shape == (dim, mlp_dim) and w2_t.shape == (mlp_dim, dim)

    dim_p = _round_up(dim, 128)
    tn = min(block_mlp, _round_up(mlp_dim, 128))
    assert tn % 128 == 0, "mlp tile must be a multiple of 128 lanes"
    mlp_p = _round_up(mlp_dim, tn)
    num_j = mlp_p // tn

    bf16, f32 = jnp.bfloat16, jnp.float32

    def pad_w(w, rows, cols):
        return jnp.zeros((rows, cols), bf16).at[: w.shape[0], : w.shape[1]].set(w.astype(bf16))

    w1_p = pad_w(w1_t, dim_p, mlp_p)
    w3_p = pad_w(w3_t, dim_p, mlp_p)
    w2_p = pad_w(w2_t, mlp_p, dim_p)

    # Fuse W1^T | W3^T into (num_j, dim_p, 2*tn): one gate/up matmul per mlp tile.
    w1_blk = w1_p.reshape(dim_p, num_j, tn).transpose(1, 0, 2)
    w3_blk = w3_p.reshape(dim_p, num_j, tn).transpose(1, 0, 2)
    w13 = jnp.concatenate([w1_blk, w3_blk], axis=-1)

    g_p = jnp.zeros((1, dim_p), f32).at[0, :dim].set(gamma.astype(f32))
    b_p = jnp.zeros((1, dim_p), f32).at[0, :dim].set(beta.astype(f32))

    return g_p, b_p, w13, w2_p


def _make_kernel(true_dim, dim_p, tn, acc_in_out):
    inv_dim = 1.0 / float(true_dim)
    needs_mask = dim_p != true_dim

    def kernel(x_ref, g_ref, b_ref, w13_ref, w2_ref, o_ref, xn_ref, *scratch):
        acc_ref = o_ref if acc_in_out else scratch[0]
        j = pl.program_id(1)

        @pl.when(j == 0)
        def _():
            # LayerNorm in f32 once per token tile, cached as bf16.
            # Two-pass (center then square) form avoids E[x^2]-mean^2 cancellation.
            x = x_ref[...].astype(jnp.float32)
            mean = jnp.sum(x, axis=-1, keepdims=True) * inv_dim  # padded cols are 0 -> exact
            xc = x - mean
            if needs_mask:
                col = lax.broadcasted_iota(jnp.int32, (1, dim_p), 1)
                xc = jnp.where(col < true_dim, xc, 0.0)
            var = jnp.sum(xc * xc, axis=-1, keepdims=True) * inv_dim
            xn = xc * lax.rsqrt(var + LN_EPS)
            xn = xn * g_ref[...] + b_ref[...]  # padded gamma/beta are zero
            xn_ref[...] = xn.astype(jnp.bfloat16)
            acc_ref[...] = jnp.zeros_like(acc_ref)

        xn = xn_ref[...]                       # (tm, dim_p) bf16, reused across mlp axis
        w13 = w13_ref[0]                       # (dim_p, 2*tn) bf16, fused W1|W3 tile

        # Single fused gate/up matmul for this mlp tile, f32 accumulation on MXU.
        h13 = jnp.dot(xn, w13, preferred_element_type=jnp.float32)  # (tm, 2*tn)
        h1 = h13[:, :tn]                       # 128-lane-aligned split (tn % 128 == 0)
        h3 = h13[:, tn:]
        h = (h1 * jax.nn.sigmoid(h1)) * h3     # SiLU gating; dropout(eval) = identity

        # Partial output projection; accumulate (resident o_ref for f32, scratch otherwise).
        acc_ref[...] += jnp.dot(h.astype(jnp.bfloat16), w2_ref[...],
                                preferred_element_type=jnp.float32)

        if not acc_in_out:
            @pl.when(j == pl.num_programs(1) - 1)
            def _():
                o_ref[...] = acc_ref[...].astype(o_ref.dtype)

    return kernel


@functools.partial(jax.jit, static_argnames=("block_tokens",))
def feed_forward(x, gamma_p, beta_p, w13, w2_p, *, block_tokens=None):
    """x: (..., dim). gamma_p/beta_p/w13/w2_p come from prepack_ffn_weights()."""
    orig_shape = x.shape
    dim = orig_shape[-1]
    num_j, dim_p, two_tn = w13.shape
    tn = two_tn // 2
    mlp_p = num_j * tn
    assert tn % 128 == 0 and dim_p % 128 == 0
    assert w2_p.shape == (mlp_p, dim_p)

    chip = _detect_chip()
    if block_tokens is None:
        block_tokens = _TILE_DEFAULTS[chip][0]
    assert block_tokens % 16 == 0

    x2d = x.reshape(-1, dim)
    n_tokens = x2d.shape[0]

    tm = min(block_tokens, _round_up(n_tokens, 16))
    # Megacore guard: v7x has 2 TensorCores; keep >= 2 token tiles when possible.
    if chip == "v7x" and _round_up(n_tokens, tm) // tm == 1 and tm > 16:
        tm = max(16, _round_up((tm + 1) // 2, 16))
    n_pad = _round_up(n_tokens, tm)
    num_i = n_pad // tm

    # Activation padding only when needed (common aligned case is a free reshape).
    if n_pad == n_tokens and dim_p == dim:
        x_p = x2d
        needs_unpad = False
    else:
        x_p = jnp.zeros((n_pad, dim_p), x.dtype).at[:n_tokens, :dim].set(x2d)
        needs_unpad = True
    # Padded token rows produce finite garbage (xn = beta) that is sliced off below.

    out_dtype = x.dtype
    acc_in_out = (out_dtype == jnp.float32)   # accumulate directly into resident o_ref

    kernel = _make_kernel(dim, dim_p, tn, acc_in_out)

    scratch = [pltpu.VMEM((tm, dim_p), jnp.bfloat16)]        # cached x_norm
    if not acc_in_out:
        scratch.append(pltpu.VMEM((tm, dim_p), jnp.float32))  # f32 accumulator

    # VMEM budget from the actual (double-buffered) tile footprint + ~25% headroom.
    x_bytes = jnp.dtype(x.dtype).itemsize
    o_bytes = jnp.dtype(out_dtype).itemsize
    footprint = (
        2 * tm * dim_p * x_bytes              # x tile
        + 2 * tm * dim_p * o_bytes            # out tile
        + 2 * dim_p * two_tn * 2              # fused W1|W3 tile (bf16)
        + 2 * tn * dim_p * 2                  # W2 tile (bf16)
        + 2 * 2 * dim_p * 4                   # gamma/beta (tiny)
        + tm * dim_p * 2                      # xn scratch
        + (0 if acc_in_out else tm * dim_p * 4)
    )
    vmem_cap = (60 << 20) if chip == "v7x" else (120 << 20)
    vmem_limit = min(max(int(footprint * 1.25) + (1 << 20), 16 << 20), vmem_cap)

    cost = pl.CostEstimate(
        flops=int(6 * n_pad * dim_p * mlp_p),                  # w13 (2*N*d*2m) + w2 (2*N*m*d)
        transcendentals=int(n_pad * mlp_p),                    # sigmoid
        bytes_accessed=int(n_pad * dim_p * (x_bytes + o_bytes)
                           + num_i * (w13.size + w2_p.size) * 2
                           + 2 * dim_p * 4),
    )

    out = pl.pallas_call(
        kernel,
        out_shape=jax.ShapeDtypeStruct((n_pad, dim_p), out_dtype),
        grid_spec=pltpu.PrefetchScalarGridSpec(
            num_scalar_prefetch=0,
            grid=(num_i, num_j),
            in_specs=[
                pl.BlockSpec((tm, dim_p), lambda i, j: (i, 0)),           # x tile
                pl.BlockSpec((1, dim_p), lambda i, j: (0, 0)),            # gamma
                pl.BlockSpec((1, dim_p), lambda i, j: (0, 0)),            # beta
                pl.BlockSpec((1, dim_p, two_tn), lambda i, j: (j, 0, 0)),  # fused W1|W3 tile
                pl.BlockSpec((tn, dim_p), lambda i, j: (j, 0)),           # W2^T tile
            ],
            out_specs=pl.BlockSpec((tm, dim_p), lambda i, j: (i, 0)),
            scratch_shapes=scratch,
        ),
        compiler_params=pltpu.CompilerParams(
            dimension_semantics=("parallel", "arbitrary"),
            vmem_limit_bytes=vmem_limit),
        cost_estimate=cost,
    )(x_p, gamma_p, beta_p, w13, w2_p)

    if needs_unpad:
        out = out[:n_tokens, :dim]
    return out.reshape(orig_shape)


def reference_ffn_bf16(x, gamma, beta, w1_t, w3_t, w2_t):
    """Reference mirroring the kernel numerics (f32 LN, bf16 matmul operands, f32 accum)."""
    xf = x.astype(jnp.float32)
    mean = jnp.mean(xf, axis=-1, keepdims=True)
    var = jnp.mean(jnp.square(xf - mean), axis=-1, keepdims=True)
    xn = (xf - mean) * lax.rsqrt(var + LN_EPS) * gamma + beta
    xnb = xn.astype(jnp.bfloat16)
    h1 = jnp.dot(xnb, w1_t.astype(jnp.bfloat16), preferred_element_type=jnp.float32)
    h3 = jnp.dot(xnb, w3_t.astype(jnp.bfloat16), preferred_element_type=jnp.float32)
    h = (h1 * jax.nn.sigmoid(h1)) * h3
    out = jnp.dot(h.astype(jnp.bfloat16), w2_t.astype(jnp.bfloat16),
                  preferred_element_type=jnp.float32)
    return out.astype(x.dtype)


def reference_ffn_f32(x, gamma, beta, w1_t, w3_t, w2_t):
    xf = x.astype(jnp.float32)
    mean = jnp.mean(xf, axis=-1, keepdims=True)
    var = jnp.mean(jnp.square(xf - mean), axis=-1, keepdims=True)
    xn = (xf - mean) * lax.rsqrt(var + LN_EPS) * gamma + beta
    h = jax.nn.silu(xn @ w1_t) * (xn @ w3_t)
    return (h @ w2_t).astype(x.dtype)


if __name__ == "__main__":
    # Small shapes consistent with the module: batch=2, seq=8, dim=32, mlp_dim=64
    batch, seq, dim, mlp_dim = 2, 8, 32, 64
    key = jax.random.PRNGKey(0)
    kx, k1, k2, k3 = jax.random.split(key, 4)

    x = jax.random.normal(kx, (batch, seq, dim), dtype=jnp.float32)

    # Deterministic parameter init (Kaiming-uniform-ish, like nn.Linear default).
    # PyTorch stores weight as (out, in); we keep the transposed (in, out) form.
    def linear_init(k, fan_in, fan_out):
        bound = 1.0 / (fan_in ** 0.5)
        return jax.random.uniform(k, (fan_in, fan_out), jnp.float32, -bound, bound)

    w1_t = linear_init(k1, dim, mlp_dim)      # Linear(dim, mlp_dim).weight.T
    w3_t = linear_init(k3, dim, mlp_dim)      # Linear(dim, mlp_dim).weight.T
    w2_t = linear_init(k2, mlp_dim, dim)      # Linear(mlp_dim, dim).weight.T
    gamma = jnp.ones((dim,), jnp.float32)     # LayerNorm weight
    beta = jnp.zeros((dim,), jnp.float32)     # LayerNorm bias

    # One-time prepack (parameter-load time), then the fused forward.
    gamma_p, beta_p, w13, w2_p = prepack_ffn_weights(gamma, beta, w1_t, w3_t, w2_t)
    out = feed_forward(x, gamma_p, beta_p, w13, w2_p)
    out = jax.block_until_ready(out)
    assert out.shape == x.shape

    # Tight check vs a reference that mirrors the kernel's bf16/f32 numerics.
    ref_bf16 = reference_ffn_bf16(x, gamma, beta, w1_t, w3_t, w2_t)
    assert jnp.allclose(out, ref_bf16, atol=1e-2, rtol=1e-2), "mismatch vs bf16 reference"

    # Looser sanity check vs the pure-f32 module semantics.
    ref_f32 = reference_ffn_f32(x, gamma, beta, w1_t, w3_t, w2_t)
    assert jnp.allclose(out, ref_f32, atol=5e-2, rtol=5e-2), "mismatch vs f32 reference"

    print("KERNEL_OK")
</pallas_src>

<mosaic_0001>
module attributes {stable_mosaic.version = 11 : i64} {
  func.func @kernel(%arg0: i32, %arg1: i32, %arg2: memref<16x128xf32, #tpu.memory_space<vmem>>, %arg3: memref<1x128xf32, #tpu.memory_space<vmem>>, %arg4: memref<1x128xf32, #tpu.memory_space<vmem>>, %arg5: memref<1x128x256xbf16, #tpu.memory_space<vmem>>, %arg6: memref<128x128xbf16, #tpu.memory_space<vmem>>, %arg7: memref<16x128xf32, #tpu.memory_space<vmem>>, %arg8: memref<16x128xbf16, #tpu.memory_space<vmem>>) attributes {dimension_semantics = [#tpu.dimension_semantics<parallel>, #tpu.dimension_semantics<arbitrary>], iteration_bounds = array<i64: 1, 1>, scalar_prefetch = 0 : i64, scratch_operands = 1 : i64, tpu.core_type = #tpu.core_type<tc>, window_params = [{transform_indices = @transform_0, window_bounds = array<i64: 16, 128>}, {pipeline_mode = #tpu.pipeline_mode<synchronous>, transform_indices = @transform_1, window_bounds = array<i64: 1, 128>}, {pipeline_mode = #tpu.pipeline_mode<synchronous>, transform_indices = @transform_2, window_bounds = array<i64: 1, 128>}, {transform_indices = @transform_3, window_bounds = array<i64: 1, 128, 256>}, {transform_indices = @transform_4, window_bounds = array<i64: 128, 128>}, {transform_indices = @transform_5, window_bounds = array<i64: 16, 128>}]} {
    %c0_i32 = arith.constant 0 : i32
    %0 = arith.cmpi eq, %arg1, %c0_i32 : i32
    %1 = arith.extui %0 : i1 to i32
    %c0_i32_0 = arith.constant 0 : i32
    %2 = arith.cmpi ne, %1, %c0_i32_0 : i32
    scf.if %2 {
      %c0_13 = arith.constant 0 : index
      %c0_14 = arith.constant 0 : index
      %22 = vector.load %arg2[%c0_13, %c0_14] : memref<16x128xf32, #tpu.memory_space<vmem>>, vector<16x128xf32>
      %cst_15 = arith.constant dense<0.000000e+00> : vector<16xf32>
      %23 = vector.multi_reduction <add>, %22, %cst_15 [1] : vector<16x128xf32> to vector<16xf32>
      %24 = vector.shape_cast %23 : vector<16xf32> to vector<16x1xf32>
      %cst_16 = arith.constant 3.125000e-02 : f32
      %25 = vector.broadcast %cst_16 : f32 to vector<16x1xf32>
      %26 = arith.mulf %24, %25 : vector<16x1xf32>
      %27 = vector.broadcast %26 : vector<16x1xf32> to vector<16x128xf32>
      %28 = arith.subf %22, %27 : vector<16x128xf32>
      %29 = tpu.iota {dimensions = array<i32: 1>} : vector<1x128xi32>
      %c32_i32 = arith.constant 32 : i32
      %30 = vector.broadcast %c32_i32 : i32 to vector<1x128xi32>
      %31 = arith.cmpi slt, %29, %30 : vector<1x128xi32>
      %cst_17 = arith.constant 0.000000e+00 : f32
      %32 = vector.shape_cast %31 : vector<1x128xi1> to vector<1x128xi1>
      %33 = vector.broadcast %32 : vector<1x128xi1> to vector<16x128xi1>
      %34 = vector.broadcast %cst_17 : f32 to vector<16x128xf32>
      %35 = arith.select %33, %28, %34 : vector<16x128xi1>, vector<16x128xf32>
      %36 = arith.mulf %35, %35 : vector<16x128xf32>
      %cst_18 = arith.constant dense<0.000000e+00> : vector<16xf32>
      %37 = vector.multi_reduction <add>, %36, %cst_18 [1] : vector<16x128xf32> to vector<16xf32>
      %38 = vector.shape_cast %37 : vector<16xf32> to vector<16x1xf32>
      %cst_19 = arith.constant 3.125000e-02 : f32
      %39 = vector.broadcast %cst_19 : f32 to vector<16x1xf32>
      %40 = arith.mulf %38, %39 : vector<16x1xf32>
      %cst_20 = arith.constant 9.99999974E-6 : f32
      %41 = vector.broadcast %cst_20 : f32 to vector<16x1xf32>
      %42 = arith.addf %40, %41 : vector<16x1xf32>
      %43 = math.rsqrt %42 : vector<16x1xf32>
      %44 = vector.broadcast %43 : vector<16x1xf32> to vector<16x128xf32>
      %45 = arith.mulf %35, %44 : vector<16x128xf32>
      %c0_21 = arith.constant 0 : index
      %c0_22 = arith.constant 0 : index
      %46 = vector.load %arg3[%c0_21, %c0_22] : memref<1x128xf32, #tpu.memory_space<vmem>>, vector<1x128xf32>
      %47 = vector.broadcast %46 : vector<1x128xf32> to vector<16x128xf32>
      %48 = arith.mulf %45, %47 : vector<16x128xf32>
      %c0_23 = arith.constant 0 : index
      %c0_24 = arith.constant 0 : index
      %49 = vector.load %arg4[%c0_23, %c0_24] : memref<1x128xf32, #tpu.memory_space<vmem>>, vector<1x128xf32>
      %50 = vector.broadcast %49 : vector<1x128xf32> to vector<16x128xf32>
      %51 = arith.addf %48, %50 : vector<16x128xf32>
      %52 = arith.truncf %51 : vector<16x128xf32> to vector<16x128xbf16>
      %c0_25 = arith.constant 0 : index
      %c0_26 = arith.constant 0 : index
      %53 = vector.load %arg8[%c0_25, %c0_26] : memref<16x128xbf16, #tpu.memory_space<vmem>>, vector<16x128xbf16>
      tpu.vector_store %arg8[%c0_25, %c0_26], %52 {strides = array<i32>} : memref<16x128xbf16, #tpu.memory_space<vmem>>, vector<16x128xbf16>,
      %cst_27 = arith.constant 0.000000e+00 : f32
      %54 = vector.broadcast %cst_27 : f32 to vector<16x128xf32>
      %c0_28 = arith.constant 0 : index
      %c0_29 = arith.constant 0 : index
      %55 = vector.load %arg7[%c0_28, %c0_29] : memref<16x128xf32, #tpu.memory_space<vmem>>, vector<16x128xf32>
      tpu.vector_store %arg7[%c0_28, %c0_29], %54 {strides = array<i32>} : memref<16x128xf32, #tpu.memory_space<vmem>>, vector<16x128xf32>,
    } else {
    }
    %c0 = arith.constant 0 : index
    %c0_1 = arith.constant 0 : index
    %3 = vector.load %arg8[%c0, %c0_1] : memref<16x128xbf16, #tpu.memory_space<vmem>>, vector<16x128xbf16>
    %c0_2 = arith.constant 0 : index
    %c0_3 = arith.constant 0 : index
    %c0_4 = arith.constant 0 : index
    %4 = vector.load %arg5[%c0_2, %c0_3, %c0_4] : memref<1x128x256xbf16, #tpu.memory_space<vmem>>, vector<1x128x256xbf16>
    %5 = vector.shape_cast %4 : vector<1x128x256xbf16> to vector<128x256xbf16>
    %cst = arith.constant dense<0.000000e+00> : vector<16x256xf32>
    %6 = tpu.matmul %3, %5, %cst {dimension_numbers = #tpu.dot_dimension_numbers<[1], [0], [0], [1], [0, 0, 1, 1], [], []>} : vector<16x128xbf16>, vector<128x256xbf16>, vector<16x256xf32> -> vector<16x256xf32>
    %7 = vector.extract_strided_slice %6 {offsets = [0, 0], sizes = [16, 128], strides = [1, 1]} : vector<16x256xf32> to vector<16x128xf32>
    %8 = vector.extract_strided_slice %6 {offsets = [0, 128], sizes = [16, 128], strides = [1, 1]} : vector<16x256xf32> to vector<16x128xf32>
    %9 = arith.negf %7 : vector<16x128xf32>
    %10 = math.exp %9 : vector<16x128xf32>
    %cst_5 = arith.constant 1.000000e+00 : f32
    %11 = vector.broadcast %cst_5 : f32 to vector<16x128xf32>
    %12 = arith.addf %11, %10 : vector<16x128xf32>
    %13 = arith.divf %11, %12 : vector<16x128xf32>
    %14 = arith.mulf %7, %13 : vector<16x128xf32>
    %15 = arith.mulf %14, %8 : vector<16x128xf32>
    %c0_6 = arith.constant 0 : index
    %c0_7 = arith.constant 0 : index
    %16 = vector.load %arg7[%c0_6, %c0_7] : memref<16x128xf32, #tpu.memory_space<vmem>>, vector<16x128xf32>
    %17 = arith.truncf %15 : vector<16x128xf32> to vector<16x128xbf16>
    %c0_8 = arith.constant 0 : index
    %c0_9 = arith.constant 0 : index
    %18 = vector.load %arg6[%c0_8, %c0_9] : memref<128x128xbf16, #tpu.memory_space<vmem>>, vector<128x128xbf16>
    %cst_10 = arith.constant dense<0.000000e+00> : vector<16x128xf32>
    %19 = tpu.matmul %17, %18, %cst_10 {dimension_numbers = #tpu.dot_dimension_numbers<[1], [0], [0], [1], [0, 0, 1, 1], [], []>} : vector<16x128xbf16>, vector<128x128xbf16>, vector<16x128xf32> -> vector<16x128xf32>
    %20 = arith.addf %16, %19 : vector<16x128xf32>
    %c0_11 = arith.constant 0 : index
    %c0_12 = arith.constant 0 : index
    %21 = vector.load %arg7[%c0_11, %c0_12] : memref<16x128xf32, #tpu.memory_space<vmem>>, vector<16x128xf32>
    tpu.vector_store %arg7[%c0_11, %c0_12], %20 {strides = array<i32>} : memref<16x128xf32, #tpu.memory_space<vmem>>, vector<16x128xf32>,
    return
  }
  func.func @transform_0(%arg0: i32, %arg1: i32) -> (i32, i32) {
    %c0_i32 = arith.constant 0 : i32
    %c0_i32_0 = arith.constant 0 : i32
    return %arg0, %c0_i32 : i32, i32
  }
  func.func @transform_1(%arg0: i32, %arg1: i32) -> (i32, i32) {
    %c0_i32 = arith.constant 0 : i32
    %c0_i32_0 = arith.constant 0 : i32
    %c0_i32_1 = arith.constant 0 : i32
    return %c0_i32, %c0_i32_0 : i32, i32
  }
  func.func @transform_2(%arg0: i32, %arg1: i32) -> (i32, i32) {
    %c0_i32 = arith.constant 0 : i32
    %c0_i32_0 = arith.constant 0 : i32
    %c0_i32_1 = arith.constant 0 : i32
    return %c0_i32, %c0_i32_0 : i32, i32
  }
  func.func @transform_3(%arg0: i32, %arg1: i32) -> (i32, i32, i32) {
    %c0_i32 = arith.constant 0 : i32
    %c0_i32_0 = arith.constant 0 : i32
    %c0_i32_1 = arith.constant 0 : i32
    return %arg1, %c0_i32, %c0_i32_0 : i32, i32, i32
  }
  func.func @transform_4(%arg0: i32, %arg1: i32) -> (i32, i32) {
    %c0_i32 = arith.constant 0 : i32
    %c0_i32_0 = arith.constant 0 : i32
    return %arg1, %c0_i32 : i32, i32
  }
  func.func @transform_5(%arg0: i32, %arg1: i32) -> (i32, i32) {
    %c0_i32 = arith.constant 0 : i32
    %c0_i32_0 = arith.constant 0 : i32
    return %arg0, %c0_i32 : i32, i32
  }
}

</mosaic_0001>

<llo_original>
// kernel: feed_forward.1
$region0: #{feed_forward.1}
  #allocation0 [shape = 'u32[]', space=smem, size = 0x4, offset = 0x4, fixed_abs, tag = 'smem constant byte address 0x4 - core index']
  #allocation1 [shape = 'u32[72,128]{1,0:T(1,128)}', space=vmem, size = 0x9000, scoped, tag = 'internal scratch']
  #allocation2 [shape = 'bf16[16,128]{1,0:T(8,128)(2,1)}', space=vmem, size = 0x1000, scoped, tag = 'scratch operand']
  %s0 = inlined_call_operand.vmem [shape: f32[16,128], index: 0, kind: input, shape index: {}]
  %s1 = inlined_call_operand.vmem [shape: f32[1,128], index: 1, kind: input, shape index: {}]
  %s2 = inlined_call_operand.vmem [shape: f32[1,128], index: 2, kind: input, shape index: {}]
  %s3 = inlined_call_operand.hbm [shape: bf16[1,128,256], index: 3, kind: input, shape index: {}]
  %s4 = inlined_call_operand.vmem [shape: bf16[128,128], index: 4, kind: input, shape index: {}]
  %s5 = inlined_call_operand.vmem [shape: f32[16,128], index: 5, kind: output, shape index: {}]
  %s6 = sld [smem:[#allocation0]]
  $region38: #{feed_forward.1} parent=0
    _
  %s8 = ssub.s32 1, %s6
  %s9 = scalar_select 0, %s8, %s6
  $region1: #{feed_forward.1} parent=0
    #allocation3 [shape = 'u8[65536]{0}', space=vmem, size = 0x10000, scoped, tag = 'input window, operand 3, single buffered']
    #allocation4 [shape = 's32[1]{0}', space=sflag, size = 0x4, scoped, tag = 'scoped memory for feed_forward.1']
    %10 = vsyncpa [#allocation4], 0
    // Predicated region
    $region2: #{feed_forward.1} parent=1 // pred_check
      _
    $region3: #{feed_forward.1} parent=1 // pred_check_branch
      %12 = sbr.rel (0) target = $region5
    $region4: #{feed_forward.1} parent=1 // pred_region
      _
    $region5: #{feed_forward.1} parent=1 // pred_fallthru
      _
    // Predicated region
    $region6: #{feed_forward.1} parent=1 // pred_check
      _
    $region7: #{feed_forward.1} parent=1 // pred_check_branch
      %14 = sbr.rel (0) target = $region9
    $region8: #{feed_forward.1} parent=1 // pred_region
      _
    $region9: #{feed_forward.1} parent=1 // pred_fallthru
      _
    // Predicated region
    $region10: #{feed_forward.1} parent=1 // pred_check
      _
    $region11: #{feed_forward.1} parent=1 // pred_check_branch
      %16 = sbr.rel (0) target = $region13
    $region12: #{feed_forward.1} parent=1 // pred_region
      _
    $region13: #{feed_forward.1} parent=1 // pred_fallthru
      _
    // Predicated region
    $region14: #{feed_forward.1} parent=1 // pred_check
      _
    $region15: #{feed_forward.1} parent=1 // pred_check_branch
      %18 = sbr.rel (0) target = $region17
    $region16: #{feed_forward.1} parent=1 // pred_region
      %20 = vsyncadd [#allocation4], 0
      %s21 = sshll.u32 %s3, 4
      %s22 = int_to_ptr.hbm [resolvable:$true] %s21
      %s23 = sshll.u32 [#allocation3], 4
      %s24 = int_to_ptr.vmem [resolvable:$true] %s23
      %29 = dma.hbm_to_vmem [thread:$0]  %s22, 2048, %s24, [#allocation4], 128, 128, 8
    $region17: #{feed_forward.1} parent=1 // pred_fallthru
      _
    // Predicated region
    $region18: #{feed_forward.1} parent=1 // pred_check
      _
    $region19: #{feed_forward.1} parent=1 // pred_check_branch
      %31 = sbr.rel (0) target = $region21
    $region20: #{feed_forward.1} parent=1 // pred_region
      _
    $region21: #{feed_forward.1} parent=1 // pred_fallthru
      _
    // Predicated region
    $region22: #{feed_forward.1} parent=1 // pred_check
      _
    $region23: #{feed_forward.1} parent=1 // pred_check_branch
      %33 = sbr.rel (0) target = $region25
    $region24: #{feed_forward.1} parent=1 // pred_region
      %35 = dma.done [#allocation4], 2048
    $region25: #{feed_forward.1} parent=1 // pred_fallthru
      _
    %p36 = scmp.eq.s32.totalorder 0, 0
    // Predicated region
    $region26: #{feed_forward.1} parent=1 // pred_check
      %p37 = pneg %p36
    $region27: #{feed_forward.1} parent=1 // pred_check_branch
      %39 = sbr.rel (%p37) target = $region29
    $region28: #{feed_forward.1} parent=1 // pred_region
      %v40 = vld [vmem:[%s0] sm:$0xff]
      %v41 = vld [vmem:[%s0 + $0x8] sm:$0xff]
      %42 = vadd.xlane.f32.xlu0 %v40
      %v43 = vpop.xlane.xlu0 %42
      %44 = vadd.xlane.f32.xlu0 %v41
      %v45 = vpop.xlane.xlu0 %44
      %v46 = vmul.f32 %v43, 0.03125
      %v47 = vmul.f32 %v45, 0.03125
      %v48 = vsub.f32 %v40, %v46
      %v49 = vsub.f32 %v41, %v47
      %v50 = vlaneseq
      %v51 = vand.u32 %v50, 127
      %vm52 = vcmp.lt.s32.totalorder %v51, 32
      %v53 = vsel %vm52, 1, 0
      %vm54 = vcmp.eq.s32.totalorder %v53, 1
      %v55 = vsel %vm54, %v48, 0.0
      %v56 = vsel %vm54, %v49, 0.0
      %v57 = vmul.f32 %v55, %v55
      %v58 = vmul.f32 %v56, %v56
      %59 = vadd.xlane.f32.xlu0 %v57
      %v60 = vpop.xlane.xlu0 %59
      %61 = vadd.xlane.f32.xlu0 %v58
      %v62 = vpop.xlane.xlu0 %61
      %v63 = vmul.f32 %v60, 0.03125
      %v64 = vmul.f32 %v62, 0.03125
      %v65 = vadd.f32 %v63, 1e-05
      %v66 = vadd.f32 %v64, 1e-05
      %v67 = vrsqrt.pop %v65
      %v68 = vmul.f32 %v67, %v65
      %v69 = vmul.f32 %v68, %v67
      %v70 = vmul.f32 0.5, %v69
      %v71 = vsub.f32 1.5, %v70
      %v72 = vmul.f32 %v67, %v71
      %vm73 = vweird.f32 %v65
      %vm74 = vweird.f32 %v67
      %vm75 = vmor %vm73, %vm74
      %v76 = vsel %vm75, %v67, %v72
      %v77 = vrsqrt.pop %v66
      %v78 = vmul.f32 %v77, %v66
      %v79 = vmul.f32 %v78, %v77
      %v80 = vmul.f32 0.5, %v79
      %v81 = vsub.f32 1.5, %v80
      %v82 = vmul.f32 %v77, %v81
      %vm83 = vweird.f32 %v66
      %vm84 = vweird.f32 %v77
      %vm85 = vmor %vm83, %vm84
      %v86 = vsel %vm85, %v77, %v82
      %v87 = vmul.f32 %v55, %v76
      %v88 = vmul.f32 %v56, %v86
      %v89 = vld [vmem:[%s1] sm:$0x1]
      %v91 = vperm.slane %v89, 0
      %v93 = vmul.f32 %v87, %v91
      %v94 = vmul.f32 %v88, %v91
      %v95 = vld [vmem:[%s2] sm:$0x1]
      %v97 = vperm.slane %v95, 0
      %v99 = vadd.f32 %v93, %v97
      %v100 = vadd.f32 %v94, %v97
      %v101 = vpack.c.bf16 %v99, %v99
      %v102 = vpack.c.bf16 %v100, %v100
      %103 = vst [vmem:[#allocation2] sm:$0xf] %v101
      %104 = vst [vmem:[#allocation2 + $0x4] sm:$0xf] %v102
      %105 = vst [vmem:[%s5] sm:$0xff] 0.0
      %106 = vst [vmem:[%s5 + $0x8] sm:$0xff] 0.0
    $region29: #{feed_forward.1} parent=1 // pred_fallthru
      _
    %v107 = vld [vmem:[#allocation2] sm:$0xf]
    %v108 = vld [vmem:[#allocation2 + $0x4] sm:$0xf]
    %v109 = vld [vmem:[#allocation3] sm:$0xff]
    %v110 = vld [vmem:[#allocation3 + $0x8] sm:$0xff]
    %v111 = vld [vmem:[#allocation3 + $0x10] sm:$0xff]
    %v112 = vld [vmem:[#allocation3 + $0x18] sm:$0xff]
    %v113 = vld [vmem:[#allocation3 + $0x20] sm:$0xff]
    %v114 = vld [vmem:[#allocation3 + $0x28] sm:$0xff]
    %v115 = vld [vmem:[#allocation3 + $0x30] sm:$0xff]
    %v116 = vld [vmem:[#allocation3 + $0x38] sm:$0xff]
    %v117 = vld [vmem:[#allocation3 + $0x40] sm:$0xff]
    %v118 = vld [vmem:[#allocation3 + $0x48] sm:$0xff]
    %v119 = vld [vmem:[#allocation3 + $0x50] sm:$0xff]
    %v120 = vld [vmem:[#allocation3 + $0x58] sm:$0xff]
    %v121 = vld [vmem:[#allocation3 + $0x60] sm:$0xff]
    %v122 = vld [vmem:[#allocation3 + $0x68] sm:$0xff]
    %v123 = vld [vmem:[#allocation3 + $0x70] sm:$0xff]
    %v124 = vld [vmem:[#allocation3 + $0x78] sm:$0xff]
    %v127 = vunpack.c.l.b16 %v107
    %v128 = vunpack.c.l.b16 %v108
    %v129 = vpack.c.b16 %v128, %v127
    %v147 = vunpack.c.l.b16 %v109
    %v148 = vunpack.c.h.b16 %v109
    %v149 = vunpack.c.l.b16 %v110
    %v150 = vunpack.c.h.b16 %v110
    %v151 = vunpack.c.l.b16 %v111
    %v152 = vunpack.c.h.b16 %v111
    %v153 = vunpack.c.l.b16 %v112
    %v154 = vunpack.c.h.b16 %v112
    %v155 = vunpack.c.l.b16 %v113
    %v156 = vunpack.c.h.b16 %v113
    %v157 = vunpack.c.l.b16 %v114
    %v158 = vunpack.c.h.b16 %v114
    %v159 = vunpack.c.l.b16 %v115
    %v160 = vunpack.c.h.b16 %v115
    %v161 = vunpack.c.l.b16 %v116
    %v162 = vunpack.c.h.b16 %v116
    %v163 = vunpack.c.l.b16 %v117
    %v164 = vunpack.c.h.b16 %v117
    %v165 = vunpack.c.l.b16 %v118
    %v166 = vunpack.c.h.b16 %v118
    %v167 = vunpack.c.l.b16 %v119
    %v168 = vunpack.c.h.b16 %v119
    %v169 = vunpack.c.l.b16 %v120
    %v170 = vunpack.c.h.b16 %v120
    %v171 = vunpack.c.l.b16 %v121
    %v172 = vunpack.c.h.b16 %v121
    %v173 = vunpack.c.l.b16 %v122
    %v174 = vunpack.c.h.b16 %v122
    %v175 = vunpack.c.l.b16 %v123
    %v176 = vunpack.c.h.b16 %v123
    %v177 = vunpack.c.l.b16 %v124
    %v178 = vunpack.c.h.b16 %v124
    %v179 = vpack.c.b16 %v149, %v147
    %v180 = vpack.c.b16 %v150, %v148
    %v181 = vpack.c.b16 %v153, %v151
    %v182 = vpack.c.b16 %v154, %v152
    %v183 = vpack.c.b16 %v157, %v155
    %v184 = vpack.c.b16 %v158, %v156
    %v185 = vpack.c.b16 %v161, %v159
    %v186 = vpack.c.b16 %v162, %v160
    %v187 = vpack.c.b16 %v165, %v163
    %v188 = vpack.c.b16 %v166, %v164
    %v189 = vpack.c.b16 %v169, %v167
    %v190 = vpack.c.b16 %v170, %v168
    %v191 = vpack.c.b16 %v173, %v171
    %v192 = vpack.c.b16 %v174, %v172
    %v193 = vpack.c.b16 %v177, %v175
    %v194 = vpack.c.b16 %v178, %v176
    %211 = vmatpush.bf16.msra.mxu0 %v193
    %212 = vmatpush.bf16.msra.mxu0 %v191
    %213 = vmatpush.bf16.msra.mxu0 %v189
    %214 = vmatpush.bf16.msra.mxu0 %v187
    %215 = vmatpush.bf16.msra.mxu0 %v185
    %216 = vmatpush.bf16.msra.mxu0 %v183
    %217 = vmatpush.bf16.msra.mxu0 %v181
    %218 = vmatpush.bf16.msra.mxu0 %v179
    %219 = vmatmul.bf16.gmra.mxu0 %v129
    %v220 = vpop.f32.mrf.mxu0
    %v221 = vadd.f32 0.0, %v220
    %v222 = vpop.f32.mrf.mxu0
    %v223 = vadd.f32 0.0, %v222
    %224 = vdwg.mxu0
    %225 = vmatpush.bf16.msra.mxu0 %v194
    %226 = vmatpush.bf16.msra.mxu0 %v192
    %227 = vmatpush.bf16.msra.mxu0 %v190
    %228 = vmatpush.bf16.msra.mxu0 %v188
    %229 = vmatpush.bf16.msra.mxu0 %v186
    %230 = vmatpush.bf16.msra.mxu0 %v184
    %231 = vmatpush.bf16.msra.mxu0 %v182
    %232 = vmatpush.bf16.msra.mxu0 %v180
    %233 = vmatmul.bf16.gmra.mxu0 %v129
    %v234 = vpop.f32.mrf.mxu0
    %v235 = vadd.f32 0.0, %v234
    %v236 = vpop.f32.mrf.mxu0
    %v237 = vadd.f32 0.0, %v236
    %238 = vdwg.mxu0
    %v239 = vxor.u32 %v221, 2147483648
    %v240 = vxor.u32 %v223, 2147483648
    %v241 = vmul.f32 %v239, 1.442695
    %v242 = vpow.pop %v241
    %v243 = vmul.f32 %v240, 1.442695
    %v244 = vpow.pop %v243
    %v245 = vadd.f32 %v242, 1.0
    %v246 = vadd.f32 %v244, 1.0
    %v247 = vrcp.pop %v245
    %v248 = vmul.f32 %v245, %v247
    %v249 = vsub.f32 1.0, %v248
    %v250 = vmul.f32 %v247, %v249
    %v251 = vadd.f32 %v247, %v250
    %vm252 = vweird.f32 %v245
    %vm253 = vweird.f32 %v247
    %vm254 = vmor %vm252, %vm253
    %v255 = vsel %vm254, %v247, %v251
    %v256 = vand.u32 2147483647, %v245
    %vm257 = vcmp.eq.f32.partialorder %v256, 8.507059e+37
    %v258 = vand.u32 %v245, 2147483648
    %v259 = vor.u32 1.1754944e-38, %v258
    %v260 = vsel %vm257, %v259, %v255
    %v261 = vmul.f32 1.0, %v260
    %v262 = vrcp.pop %v246
    %v263 = vmul.f32 %v246, %v262
    %v264 = vsub.f32 1.0, %v263
    %v265 = vmul.f32 %v262, %v264
    %v266 = vadd.f32 %v262, %v265
    %vm267 = vweird.f32 %v246
    %vm268 = vweird.f32 %v262
    %vm269 = vmor %vm267, %vm268
    %v270 = vsel %vm269, %v262, %v266
    %v271 = vand.u32 2147483647, %v246
    %vm272 = vcmp.eq.f32.partialorder %v271, 8.507059e+37
    %v273 = vand.u32 %v246, 2147483648
    %v274 = vor.u32 1.1754944e-38, %v273
    %v275 = vsel %vm272, %v274, %v270
    %v276 = vmul.f32 1.0, %v275
    %v277 = vmul.f32 %v221, %v261
    %v278 = vmul.f32 %v223, %v276
    %v279 = vmul.f32 %v277, %v235
    %v280 = vmul.f32 %v278, %v237
    %v281 = vld [vmem:[%s5] sm:$0xff]
    %v282 = vld [vmem:[%s5 + $0x8] sm:$0xff]
    %v283 = vpack.c.bf16 %v280, %v279
    %v284 = vld [vmem:[%s4] sm:$0xf]
    %v285 = vld [vmem:[%s4 + $0x4] sm:$0xf]
    %v286 = vld [vmem:[%s4 + $0x8] sm:$0xf]
    %v287 = vld [vmem:[%s4 + $0xc] sm:$0xf]
    %v288 = vld [vmem:[%s4 + $0x10] sm:$0xf]
    %v289 = vld [vmem:[%s4 + $0x14] sm:$0xf]
    %v290 = vld [vmem:[%s4 + $0x18] sm:$0xf]
    %v291 = vld [vmem:[%s4 + $0x1c] sm:$0xf]
    %v292 = vld [vmem:[%s4 + $0x20] sm:$0xf]
    %v293 = vld [vmem:[%s4 + $0x24] sm:$0xf]
    %v294 = vld [vmem:[%s4 + $0x28] sm:$0xf]
    %v295 = vld [vmem:[%s4 + $0x2c] sm:$0xf]
    %v296 = vld [vmem:[%s4 + $0x30] sm:$0xf]
    %v297 = vld [vmem:[%s4 + $0x34] sm:$0xf]
    %v298 = vld [vmem:[%s4 + $0x38] sm:$0xf]
    %v299 = vld [vmem:[%s4 + $0x3c] sm:$0xf]
    %v316 = vunpack.c.l.b16 %v284
    %v317 = vunpack.c.l.b16 %v285
    %v318 = vunpack.c.l.b16 %v286
    %v319 = vunpack.c.l.b16 %v287
    %v320 = vunpack.c.l.b16 %v288
    %v321 = vunpack.c.l.b16 %v289
    %v322 = vunpack.c.l.b16 %v290
    %v323 = vunpack.c.l.b16 %v291
    %v324 = vunpack.c.l.b16 %v292
    %v325 = vunpack.c.l.b16 %v293
    %v326 = vunpack.c.l.b16 %v294
    %v327 = vunpack.c.l.b16 %v295
    %v328 = vunpack.c.l.b16 %v296
    %v329 = vunpack.c.l.b16 %v297
    %v330 = vunpack.c.l.b16 %v298
    %v331 = vunpack.c.l.b16 %v299
    %v332 = vpack.c.b16 %v317, %v316
    %v333 = vpack.c.b16 %v319, %v318
    %v334 = vpack.c.b16 %v321, %v320
    %v335 = vpack.c.b16 %v323, %v322
    %v336 = vpack.c.b16 %v325, %v324
    %v337 = vpack.c.b16 %v327, %v326
    %v338 = vpack.c.b16 %v329, %v328
    %v339 = vpack.c.b16 %v331, %v330
    %348 = vmatpush.bf16.msra.mxu0 %v339
    %349 = vmatpush.bf16.msra.mxu0 %v338
    %350 = vmatpush.bf16.msra.mxu0 %v337
    %351 = vmatpush.bf16.msra.mxu0 %v336
    %352 = vmatpush.bf16.msra.mxu0 %v335
    %353 = vmatpush.bf16.msra.mxu0 %v334
    %354 = vmatpush.bf16.msra.mxu0 %v333
    %355 = vmatpush.bf16.msra.mxu0 %v332
    %356 = vmatmul.bf16.gmra.mxu0 %v283
    %v357 = vpop.f32.mrf.mxu0
    %v358 = vadd.f32 0.0, %v357
    %v359 = vpop.f32.mrf.mxu0
    %v360 = vadd.f32 0.0, %v359
    %361 = vdwg.mxu0
    %v362 = vadd.f32 %v281, %v358
    %v363 = vadd.f32 %v282, %v360
    %364 = vst [vmem:[%s5] sm:$0xff] %v362
    %365 = vst [vmem:[%s5 + $0x8] sm:$0xff] %v363
    // Predicated region
    $region30: #{feed_forward.1} parent=1 // pred_check
      _
    $region31: #{feed_forward.1} parent=1 // pred_check_branch
      %367 = sbr.rel (0) target = $region33
    $region32: #{feed_forward.1} parent=1 // pred_region
      _
    $region33: #{feed_forward.1} parent=1 // pred_fallthru
      _
    // Predicated region
    $region34: #{feed_forward.1} parent=1 // pred_check
      _
    $region35: #{feed_forward.1} parent=1 // pred_check_branch
      %369 = sbr.rel (0) target = $region37
    $region36: #{feed_forward.1} parent=1 // pred_region
      _
    $region37: #{feed_forward.1} parent=1 // pred_fallthru
      _
    %370 = vsyncpa [#allocation4], 1

</llo_original>
